<compile_context>
chip_gen: v5e
topology: v5e:2x2
jax: 0.10.0
libtpu: 0.0.40
codegen_flags: <defaults>
</compile_context>

<pallas_src>
import jax
import jax.numpy as jnp
from jax.experimental import pallas as pl
from jax.experimental.pallas import tpu as pltpu


def _hbm_copy_kernel(x_hbm, o_hbm, sem):
    # Whole-tensor HBM -> HBM DMA.  No VMEM staging, no vld/vst slot usage,
    # no grid; a single descriptor keeps the DMA engine at HBM roofline.
    cp = pltpu.make_async_copy(x_hbm, o_hbm, sem)
    cp.start()
    cp.wait()


def cbow_forward(x):
    """Pallas 'forward' for the (empty) CBOW module: identity pass over x."""
    if x.ndim == 0 or x.size == 0:
        # Nothing to DMA; the truly faithful no-op path.
        return x

    return pl.pallas_call(
        _hbm_copy_kernel,
        out_shape=jax.ShapeDtypeStruct(x.shape, x.dtype),
        in_specs=[pl.BlockSpec(memory_space=pl.ANY)],
        out_specs=pl.BlockSpec(memory_space=pl.ANY),
        scratch_shapes=[pltpu.SemaphoreType.DMA(())],
    )(x)


if __name__ == "__main__":
    key = jax.random.PRNGKey(0)

    # Small CBOW-style input: batch=2, context window=8, hidden=128.
    x = jax.random.normal(key, (2, 8, 128), dtype=jnp.float32)
    out = cbow_forward(x)
    jax.block_until_ready(out)
    assert out.shape == x.shape and out.dtype == x.dtype
    assert bool(jnp.all(out == x))

    # Larger, non-(8,128)-friendly shape/dtype: confirms the DMA path is
    # shape- and layout-agnostic (no tiling constraints apply).
    x_big = jax.random.normal(jax.random.PRNGKey(0), (2048, 384), dtype=jnp.bfloat16)
    out_big = cbow_forward(x_big)
    jax.block_until_ready(out_big)
    assert out_big.shape == x_big.shape
    assert bool(jnp.all(out_big == x_big))

    print("KERNEL_OK")
</pallas_src>

<mosaic_0001>
module attributes {stable_mosaic.version = 11 : i64} {
  func.func @_hbm_copy_kernel(%arg0: memref<2x8x128xf32, #tpu.memory_space<any>>, %arg1: memref<2x8x128xf32, #tpu.memory_space<any>>, %arg2: memref<!tpu.dma_semaphore, #tpu.memory_space<semaphore_mem>>) attributes {dimension_semantics = [], scalar_prefetch = 0 : i64, scratch_operands = 1 : i64, tpu.core_type = #tpu.core_type<tc>} {
    tpu.enqueue_dma source(%arg0 : memref<2x8x128xf32, #tpu.memory_space<any>>) target(%arg1 : memref<2x8x128xf32, #tpu.memory_space<any>>) target_semaphore(%arg2 : memref<!tpu.dma_semaphore, #tpu.memory_space<semaphore_mem>>)
    tpu.wait_dma2 semaphore(%arg2 : memref<!tpu.dma_semaphore, #tpu.memory_space<semaphore_mem>>) src(%arg0 : memref<2x8x128xf32, #tpu.memory_space<any>>) dst(%arg1 : memref<2x8x128xf32, #tpu.memory_space<any>>)
    return
  }
}

</mosaic_0001>

<llo_original>
// kernel: tpu_custom_call.1
$region0: #{tpu_custom_call.1}
  #allocation0 [shape = 'u32[]', space=smem, size = 0x4, offset = 0x4, fixed_abs, tag = 'smem constant byte address 0x4 - core index']
  #allocation1 [shape = 'u32[72,128]{1,0:T(1,128)}', space=vmem, size = 0x9000, scoped, tag = 'internal scratch']
  #allocation2 [shape = 's32[1]{0}', space=sflag, size = 0x4, scoped, tag = 'scratch operand']
  #allocation3 [shape = 's32[]', space=sflag, size = 0x4, offset = 0, fixed_abs, tag = 'sflag constant byte address 0x0 - dummy sync flag']
  #allocation4 [shape = 'u32[0]{0}', space=smem, size = 0, offset = 0, fixed_abs, tag = 'smem constant byte address 0x0 - null']
  %s0 = inlined_call_operand.hbm [shape: f32[2,8,128], index: 0, kind: input, shape index: {}]
  %s1 = inlined_call_operand.hbm [shape: f32[2,8,128], index: 1, kind: output, shape index: {}]
  %s2 = sld [smem:[#allocation0]]
  $region2: #{tpu_custom_call.1} parent=0
    _
  %s4 = ssub.s32 1, %s2
  %s5 = scalar_select 0, %s4, %s2
  %s7 = sshll.u32 1, 14
  %s8 = sxor.u32 4294967295, %s7
  %s10 = sshll.u32 %s0, 4
  %s11 = int_to_ptr.hbm [resolvable:$true] %s10
  %s12 = sshll.u32 %s1, 4
  %s13 = int_to_ptr.hbm [resolvable:$true] %s12
  %16 = dma.general %s11, 256, %s13, [#allocation2], [#allocation3], [#allocation4], 0, 0
  %s17 = smul.u32 2, 8
  %s18 = smul.u32 %s17, 1
  %s19 = sshll.u32 %s18, 4
  %20 = dma.done [#allocation2], %s19
  %21 = vsyncmov [#allocation2]
  %s22 = vpop.sfrf %21
  %p23 = scmp.eq.s32.totalorder %s22, 0
  %p24 = pneg %p23
  %26 = shalt.err (%p24)

</llo_original>
